<compile_context>
chip_gen: v5e
topology: v5e:2x2
jax: 0.10.0
libtpu: 0.0.40
codegen_flags: <defaults>
</compile_context>

<pallas_src>
import math
import functools

import jax
import jax.numpy as jnp
from jax.experimental import pallas as pl
from jax.experimental.pallas import tpu as pltpu


def _gelu_tanh(x):
    c = math.sqrt(2.0 / math.pi)
    return 0.5 * x * (1.0 + jnp.tanh(c * (x + 0.044715 * x * x * x)))


def _intermediate_kernel(x_ref, w_ref, b_ref, o_ref, acc_ref):
    """One (tm, tn) output tile; grid axis 2 iterates the K (hidden) reduction."""
    k = pl.program_id(2)

    @pl.when(k == 0)
    def _():
        acc_ref[...] = jnp.zeros_like(acc_ref)

    acc_ref[...] += jnp.dot(x_ref[...], w_ref[...],
                            preferred_element_type=jnp.float32)

    @pl.when(k == pl.num_programs(2) - 1)
    def _():
        y = acc_ref[...] + b_ref[...]            # (tm, tn) + (1, tn) bias
        o_ref[...] = _gelu_tanh(y).astype(o_ref.dtype)


def _fit_tile(dim, target, align):
    """Largest tile <= target that divides `dim` and is `align`-aligned;
    falls back to the full dim (block == array dim is always legal)."""
    if dim <= target:
        return dim
    t = (target // align) * align
    while t >= align:
        if dim % t == 0:
            return t
        t -= align
    return dim


def bert_intermediate(hidden, weight, bias, *,
                      tm=256, tn=512, tk=512, compute_dtype=None):
    """hidden: (B, S, H) f32; weight: (H, I) (in, out layout); bias: (I,)."""
    B, S, H = hidden.shape
    I = weight.shape[1]
    out_dtype = hidden.dtype

    M = B * S
    x = hidden.reshape(M, H)
    if compute_dtype is not None:                 # bf16 MXU path for v6e/v7x
        x = x.astype(compute_dtype)
        weight = weight.astype(compute_dtype)
    b2d = bias.reshape(1, I)

    tm = _fit_tile(M, tm, 8)
    tn = _fit_tile(I, tn, 128)
    tk = _fit_tile(H, tk, 128)

    # VMEM budget: double-buffered x / w / bias / out tiles + f32 accumulator.
    in_sz = jnp.dtype(x.dtype).itemsize
    out_sz = jnp.dtype(out_dtype).itemsize
    est = (2 * (tm * tk + tk * tn + tn) * in_sz
           + 2 * tm * tn * out_sz
           + tm * tn * 4)
    vmem_limit = int(min(max(2 * est, 16 << 20), 96 << 20))

    grid = (M // tm, I // tn, H // tk)

    grid_spec = pltpu.PrefetchScalarGridSpec(
        num_scalar_prefetch=0,
        grid=grid,
        in_specs=[
            pl.BlockSpec((tm, tk), lambda i, j, k: (i, k)),   # x rows
            pl.BlockSpec((tk, tn), lambda i, j, k: (k, j)),   # weight
            pl.BlockSpec((1, tn), lambda i, j, k: (0, j)),    # bias
        ],
        out_specs=pl.BlockSpec((tm, tn), lambda i, j, k: (i, j)),
        scratch_shapes=[pltpu.VMEM((tm, tn), jnp.float32)],
    )

    out = pl.pallas_call(
        _intermediate_kernel,
        out_shape=jax.ShapeDtypeStruct((M, I), out_dtype),
        grid_spec=grid_spec,
        compiler_params=pltpu.CompilerParams(
            dimension_semantics=("parallel", "parallel", "arbitrary"),
            vmem_limit_bytes=vmem_limit),
    )(x, weight, b2d)

    return out.reshape(B, S, I)


def _reference(hidden, weight, bias):
    y = hidden @ weight + bias
    return _gelu_tanh(y)


if __name__ == "__main__":
    B, S, H, I = 2, 8, 32, 128          # intermediate_size = 4 * hidden_size
    key = jax.random.PRNGKey(0)
    k0, k1, k2 = jax.random.split(key, 3)

    hidden = jax.random.normal(k0, (B, S, H), jnp.float32)
    weight = jax.random.normal(k1, (H, I), jnp.float32) * 0.02   # (in, out) layout
    bias = jax.random.normal(k2, (I,), jnp.float32) * 0.02

    out = bert_intermediate(hidden, weight, bias)
    out = jax.block_until_ready(out)

    ref = _reference(hidden, weight, bias)
    assert out.shape == (B, S, I)
    assert jnp.allclose(out, ref, atol=1e-4, rtol=1e-4), "mismatch vs JAX reference"

    print("KERNEL_OK")
</pallas_src>

<mosaic_0001>
module attributes {stable_mosaic.version = 11 : i64} {
  func.func @_intermediate_kernel(%arg0: i32, %arg1: i32, %arg2: i32, %arg3: memref<16x32xf32, #tpu.memory_space<vmem>>, %arg4: memref<32x128xf32, #tpu.memory_space<vmem>>, %arg5: memref<1x128xf32, #tpu.memory_space<vmem>>, %arg6: memref<16x128xf32, #tpu.memory_space<vmem>>, %arg7: memref<16x128xf32, #tpu.memory_space<vmem>>) attributes {dimension_semantics = [#tpu.dimension_semantics<parallel>, #tpu.dimension_semantics<parallel>, #tpu.dimension_semantics<arbitrary>], iteration_bounds = array<i64: 1, 1, 1>, scalar_prefetch = 0 : i64, scratch_operands = 1 : i64, tpu.core_type = #tpu.core_type<tc>, window_params = [{transform_indices = @transform_0, window_bounds = array<i64: 16, 32>}, {transform_indices = @transform_1, window_bounds = array<i64: 32, 128>}, {transform_indices = @transform_2, window_bounds = array<i64: 1, 128>}, {transform_indices = @transform_3, window_bounds = array<i64: 16, 128>}]} {
    %c0_i32 = arith.constant 0 : i32
    %0 = arith.cmpi eq, %arg2, %c0_i32 : i32
    %1 = arith.extui %0 : i1 to i32
    %c0_i32_0 = arith.constant 0 : i32
    %2 = arith.cmpi ne, %1, %c0_i32_0 : i32
    scf.if %2 {
      %cst_10 = arith.constant 0.000000e+00 : f32
      %12 = vector.broadcast %cst_10 : f32 to vector<16x128xf32>
      %c0_11 = arith.constant 0 : index
      %c0_12 = arith.constant 0 : index
      %13 = vector.load %arg7[%c0_11, %c0_12] : memref<16x128xf32, #tpu.memory_space<vmem>>, vector<16x128xf32>
      tpu.vector_store %arg7[%c0_11, %c0_12], %12 {strides = array<i32>} : memref<16x128xf32, #tpu.memory_space<vmem>>, vector<16x128xf32>,
    } else {
    }
    %c0 = arith.constant 0 : index
    %c0_1 = arith.constant 0 : index
    %3 = vector.load %arg7[%c0, %c0_1] : memref<16x128xf32, #tpu.memory_space<vmem>>, vector<16x128xf32>
    %c0_2 = arith.constant 0 : index
    %c0_3 = arith.constant 0 : index
    %4 = vector.load %arg3[%c0_2, %c0_3] : memref<16x32xf32, #tpu.memory_space<vmem>>, vector<16x32xf32>
    %c0_4 = arith.constant 0 : index
    %c0_5 = arith.constant 0 : index
    %5 = vector.load %arg4[%c0_4, %c0_5] : memref<32x128xf32, #tpu.memory_space<vmem>>, vector<32x128xf32>
    %cst = arith.constant dense<0.000000e+00> : vector<16x128xf32>
    %6 = tpu.matmul %4, %5, %cst {dimension_numbers = #tpu.dot_dimension_numbers<[1], [0], [0], [1], [0, 0, 1, 1], [], []>} : vector<16x32xf32>, vector<32x128xf32>, vector<16x128xf32> -> vector<16x128xf32>
    %7 = arith.addf %3, %6 : vector<16x128xf32>
    %c0_6 = arith.constant 0 : index
    %c0_7 = arith.constant 0 : index
    %8 = vector.load %arg7[%c0_6, %c0_7] : memref<16x128xf32, #tpu.memory_space<vmem>>, vector<16x128xf32>
    tpu.vector_store %arg7[%c0_6, %c0_7], %7 {strides = array<i32>} : memref<16x128xf32, #tpu.memory_space<vmem>>, vector<16x128xf32>,
    %c0_i32_8 = arith.constant 0 : i32
    %9 = arith.cmpi eq, %arg2, %c0_i32_8 : i32
    %10 = arith.extui %9 : i1 to i32
    %c0_i32_9 = arith.constant 0 : i32
    %11 = arith.cmpi ne, %10, %c0_i32_9 : i32
    scf.if %11 {
      %c0_10 = arith.constant 0 : index
      %c0_11 = arith.constant 0 : index
      %12 = vector.load %arg7[%c0_10, %c0_11] : memref<16x128xf32, #tpu.memory_space<vmem>>, vector<16x128xf32>
      %c0_12 = arith.constant 0 : index
      %c0_13 = arith.constant 0 : index
      %13 = vector.load %arg5[%c0_12, %c0_13] : memref<1x128xf32, #tpu.memory_space<vmem>>, vector<1x128xf32>
      %14 = vector.broadcast %13 : vector<1x128xf32> to vector<16x128xf32>
      %15 = arith.addf %12, %14 : vector<16x128xf32>
      %cst_14 = arith.constant 5.000000e-01 : f32
      %16 = vector.broadcast %cst_14 : f32 to vector<16x128xf32>
      %17 = arith.mulf %16, %15 : vector<16x128xf32>
      %cst_15 = arith.constant 4.471500e-02 : f32
      %18 = vector.broadcast %cst_15 : f32 to vector<16x128xf32>
      %19 = arith.mulf %18, %15 : vector<16x128xf32>
      %20 = arith.mulf %19, %15 : vector<16x128xf32>
      %21 = arith.mulf %20, %15 : vector<16x128xf32>
      %22 = arith.addf %15, %21 : vector<16x128xf32>
      %cst_16 = arith.constant 0.797884583 : f32
      %23 = vector.broadcast %cst_16 : f32 to vector<16x128xf32>
      %24 = arith.mulf %23, %22 : vector<16x128xf32>
      %25 = math.tanh %24 : vector<16x128xf32>
      %cst_17 = arith.constant 1.000000e+00 : f32
      %26 = vector.broadcast %cst_17 : f32 to vector<16x128xf32>
      %27 = arith.addf %26, %25 : vector<16x128xf32>
      %28 = arith.mulf %17, %27 : vector<16x128xf32>
      %c0_18 = arith.constant 0 : index
      %c0_19 = arith.constant 0 : index
      %29 = vector.load %arg6[%c0_18, %c0_19] : memref<16x128xf32, #tpu.memory_space<vmem>>, vector<16x128xf32>
      tpu.vector_store %arg6[%c0_18, %c0_19], %28 {strides = array<i32>} : memref<16x128xf32, #tpu.memory_space<vmem>>, vector<16x128xf32>,
    } else {
    }
    return
  }
  func.func @transform_0(%arg0: i32, %arg1: i32, %arg2: i32) -> (i32, i32) {
    %c0_i32 = arith.constant 0 : i32
    return %arg0, %arg2 : i32, i32
  }
  func.func @transform_1(%arg0: i32, %arg1: i32, %arg2: i32) -> (i32, i32) {
    %c0_i32 = arith.constant 0 : i32
    return %arg2, %arg1 : i32, i32
  }
  func.func @transform_2(%arg0: i32, %arg1: i32, %arg2: i32) -> (i32, i32) {
    %c0_i32 = arith.constant 0 : i32
    %c0_i32_0 = arith.constant 0 : i32
    return %c0_i32, %arg1 : i32, i32
  }
  func.func @transform_3(%arg0: i32, %arg1: i32, %arg2: i32) -> (i32, i32) {
    %c0_i32 = arith.constant 0 : i32
    return %arg0, %arg1 : i32, i32
  }
}

</mosaic_0001>

<llo_original>
// kernel: tpu_custom_call.1
$region0: #{tpu_custom_call.1}
  #allocation0 [shape = 'u32[]', space=smem, size = 0x4, offset = 0x4, fixed_abs, tag = 'smem constant byte address 0x4 - core index']
  #allocation1 [shape = 'u32[72,128]{1,0:T(1,128)}', space=vmem, size = 0x9000, scoped, tag = 'internal scratch']
  #allocation2 [shape = 'f32[16,128]{1,0:T(8,128)}', space=vmem, size = 0x2000, scoped, tag = 'scratch operand']
  %s0 = inlined_call_operand.hbm [shape: f32[16,32], index: 0, kind: input, shape index: {}]
  %s1 = inlined_call_operand.hbm [shape: f32[32,128], index: 1, kind: input, shape index: {}]
  %s2 = inlined_call_operand.vmem [shape: f32[1,128], index: 2, kind: input, shape index: {}]
  %s3 = inlined_call_operand.hbm [shape: f32[16,128], index: 3, kind: output, shape index: {}]
  %s4 = sld [smem:[#allocation0]]
  $region38: #{tpu_custom_call.1} parent=0
    _
  %s6 = ssub.s32 1, %s4
  %s7 = scalar_select 0, %s6, %s4
  $region1: #{tpu_custom_call.1} parent=0
    #allocation3 [shape = 'u8[8192]{0}', space=vmem, size = 0x2000, scoped, tag = 'input window, operand 0, single buffered']
    #allocation4 [shape = 's32[1]{0}', space=sflag, size = 0x4, scoped, tag = 'scoped memory for tpu_custom_call.1']
    #allocation5 [shape = 's32[1]{0}', space=sflag, size = 0x4, scoped, tag = 'scoped memory for tpu_custom_call.1']
    #allocation6 [shape = 'u8[16384]{0}', space=vmem, size = 0x4000, scoped, tag = 'input window, operand 1, single buffered']
    #allocation7 [shape = 's32[1]{0}', space=sflag, size = 0x4, scoped, tag = 'scoped memory for tpu_custom_call.1']
    #allocation8 [shape = 'u8[8192]{0}', space=vmem, size = 0x2000, scoped, tag = 'output window, operand 0, single buffered']
    %8 = vsyncpa [#allocation4], 0
    %9 = vsyncpa [#allocation7], 0
    %10 = vsyncpa [#allocation5], 0
    // Predicated region
    $region2: #{tpu_custom_call.1} parent=1 // pred_check
      _
    $region3: #{tpu_custom_call.1} parent=1 // pred_check_branch
      %12 = sbr.rel (0) target = $region5
    $region4: #{tpu_custom_call.1} parent=1 // pred_region
      %14 = vsyncadd [#allocation4], 0
      %s15 = sshll.u32 %s0, 4
      %s16 = int_to_ptr.hbm [resolvable:$true] %s15
      %s17 = sshll.u32 [#allocation3], 4
      %s18 = int_to_ptr.vmem [resolvable:$true] %s17
      %23 = dma.hbm_to_vmem [thread:$0]  %s16, 256, %s18, [#allocation4], 128, 128, 8
    $region5: #{tpu_custom_call.1} parent=1 // pred_fallthru
      _
    // Predicated region
    $region6: #{tpu_custom_call.1} parent=1 // pred_check
      _
    $region7: #{tpu_custom_call.1} parent=1 // pred_check_branch
      %25 = sbr.rel (0) target = $region9
    $region8: #{tpu_custom_call.1} parent=1 // pred_region
      %27 = vsyncadd [#allocation7], 0
      %s28 = sshll.u32 %s1, 4
      %s29 = int_to_ptr.hbm [resolvable:$true] %s28
      %s30 = sshll.u32 [#allocation6], 4
      %s31 = int_to_ptr.vmem [resolvable:$true] %s30
      %36 = dma.hbm_to_vmem [thread:$0]  %s29, 512, %s31, [#allocation7], 128, 128, 8
    $region9: #{tpu_custom_call.1} parent=1 // pred_fallthru
      _
    // Predicated region
    $region10: #{tpu_custom_call.1} parent=1 // pred_check
      _
    $region11: #{tpu_custom_call.1} parent=1 // pred_check_branch
      %38 = sbr.rel (0) target = $region13
    $region12: #{tpu_custom_call.1} parent=1 // pred_region
      _
    $region13: #{tpu_custom_call.1} parent=1 // pred_fallthru
      _
    // Predicated region
    $region14: #{tpu_custom_call.1} parent=1 // pred_check
      _
    $region15: #{tpu_custom_call.1} parent=1 // pred_check_branch
      %40 = sbr.rel (0) target = $region17
    $region16: #{tpu_custom_call.1} parent=1 // pred_region
      %42 = dma.done [#allocation4], 256
    $region17: #{tpu_custom_call.1} parent=1 // pred_fallthru
      _
    // Predicated region
    $region18: #{tpu_custom_call.1} parent=1 // pred_check
      _
    $region19: #{tpu_custom_call.1} parent=1 // pred_check_branch
      %44 = sbr.rel (0) target = $region21
    $region20: #{tpu_custom_call.1} parent=1 // pred_region
      %46 = dma.done [#allocation7], 512
    $region21: #{tpu_custom_call.1} parent=1 // pred_fallthru
      _
    %p47 = scmp.eq.s32.totalorder 0, 0
    // Predicated region
    $region22: #{tpu_custom_call.1} parent=1 // pred_check
      %p48 = pneg %p47
    $region23: #{tpu_custom_call.1} parent=1 // pred_check_branch
      %50 = sbr.rel (%p48) target = $region25
    $region24: #{tpu_custom_call.1} parent=1 // pred_region
      %51 = vst [vmem:[#allocation2] sm:$0xff] 0.0
      %52 = vst [vmem:[#allocation2 + $0x8] sm:$0xff] 0.0
    $region25: #{tpu_custom_call.1} parent=1 // pred_fallthru
      _
    %v53 = vld [vmem:[#allocation2] sm:$0xff]
    %v54 = vld [vmem:[#allocation2 + $0x8] sm:$0xff]
    %v55 = vld [vmem:[#allocation3] sm:$0xff]
    %v56 = vld [vmem:[#allocation3 + $0x8] sm:$0xff]
    %v57 = vld [vmem:[#allocation6] sm:$0xff]
    %v58 = vld [vmem:[#allocation6 + $0x8] sm:$0xff]
    %v59 = vld [vmem:[#allocation6 + $0x10] sm:$0xff]
    %v60 = vld [vmem:[#allocation6 + $0x18] sm:$0xff]
    %vm61 = vcmask 261120
    %v63 = vsel %vm61, %v55, 0
    %v66 = vsel %vm61, %v56, 0
    %68 = vmatpush.msra.mxu0 0.0
    %69 = vmatpush.msra.mxu0 0.0
    %70 = vmatpush.msra.mxu0 0.0
    %71 = vmatpush.msra.mxu0 0.0
    %72 = vmatpush.msra.mxu0 0.0
    %73 = vmatpush.msra.mxu0 0.0
    %74 = vmatpush.msra.mxu0 0.0
    %75 = vmatpush.msra.mxu0 0.0
    %76 = vmatpush.msra.mxu0 0.0
    %77 = vmatpush.msra.mxu0 0.0
    %78 = vmatpush.msra.mxu0 0.0
    %79 = vmatpush.msra.mxu0 0.0
    %80 = vmatpush.msra.mxu0 %v60
    %81 = vmatpush.msra.mxu0 %v59
    %82 = vmatpush.msra.mxu0 %v58
    %83 = vmatpush.msra.mxu0 %v57
    %84 = vmatmul.f32.gmra.mxu0 %v63
    %v85 = vpop.f32.mrf.mxu0
    %v86 = vadd.f32 0.0, %v85
    %87 = vmatmul.f32.gmra.mxu0 %v66
    %v88 = vpop.f32.mrf.mxu0
    %v89 = vadd.f32 0.0, %v88
    %90 = vdwg.mxu0
    %v91 = vadd.f32 %v53, %v86
    %v92 = vadd.f32 %v54, %v89
    %93 = vst [vmem:[#allocation2] sm:$0xff] %v91
    %94 = vst [vmem:[#allocation2 + $0x8] sm:$0xff] %v92
    // Predicated region
    $region26: #{tpu_custom_call.1} parent=1 // pred_check
      %p95 = pneg %p47
    $region27: #{tpu_custom_call.1} parent=1 // pred_check_branch
      %97 = sbr.rel (%p95) target = $region29
    $region28: #{tpu_custom_call.1} parent=1 // pred_region
      %v98 = vld [vmem:[#allocation2] sm:$0xff]
      %v99 = vld [vmem:[#allocation2 + $0x8] sm:$0xff]
      %v100 = vld [vmem:[%s2] sm:$0x1]
      %v102 = vperm.slane %v100, 0
      %v104 = vadd.f32 %v98, %v102
      %v105 = vadd.f32 %v99, %v102
      %v106 = vmul.f32 %v104, 0.5
      %v107 = vmul.f32 %v105, 0.5
      %v108 = vmul.f32 %v104, 0.044715
      %v109 = vmul.f32 %v105, 0.044715
      %v110 = vmul.f32 %v108, %v104
      %v111 = vmul.f32 %v109, %v105
      %v112 = vmul.f32 %v110, %v104
      %v113 = vmul.f32 %v111, %v105
      %v114 = vadd.f32 %v104, %v112
      %v115 = vadd.f32 %v105, %v113
      %v116 = vmul.f32 %v114, 0.7978846
      %v117 = vmul.f32 %v115, 0.7978846
      %v118 = vtanh.pop %v116
      %v119 = vtanh.pop %v117
      %v120 = vadd.f32 %v118, 1.0
      %v121 = vadd.f32 %v119, 1.0
      %v122 = vmul.f32 %v106, %v120
      %v123 = vmul.f32 %v107, %v121
      %124 = vst [vmem:[#allocation8] sm:$0xff] %v122
      %125 = vst [vmem:[#allocation8 + $0x8] sm:$0xff] %v123
    $region29: #{tpu_custom_call.1} parent=1 // pred_fallthru
      _
    // Predicated region
    $region30: #{tpu_custom_call.1} parent=1 // pred_check
      _
    $region31: #{tpu_custom_call.1} parent=1 // pred_check_branch
      %127 = sbr.rel (0) target = $region33
    $region32: #{tpu_custom_call.1} parent=1 // pred_region
      %129 = vsyncadd [#allocation5], 0
      %s130 = sshll.u32 [#allocation8], 4
      %s131 = int_to_ptr.vmem [resolvable:$true] %s130
      %s132 = sshll.u32 %s3, 4
      %s133 = int_to_ptr.hbm [resolvable:$true] %s132
      %138 = dma.vmem_to_hbm [thread:$0]  %s131, 256, %s133, [#allocation5], 128, 128, 8
    $region33: #{tpu_custom_call.1} parent=1 // pred_fallthru
      _
    // Predicated region
    $region34: #{tpu_custom_call.1} parent=1 // pred_check
      _
    $region35: #{tpu_custom_call.1} parent=1 // pred_check_branch
      %140 = sbr.rel (0) target = $region37
    $region36: #{tpu_custom_call.1} parent=1 // pred_region
      %142 = dma.done [#allocation5], 256
    $region37: #{tpu_custom_call.1} parent=1 // pred_fallthru
      _
    %143 = vsyncpa [#allocation4], 1
    %144 = vsyncpa [#allocation7], 1
    %145 = vsyncpa [#allocation5], 1

</llo_original>
